<compile_context>
chip_gen: v5e
topology: v5e:2x2
jax: 0.10.0
libtpu: 0.0.40
codegen_flags: <defaults>
</compile_context>

<pallas_src>
import math

import jax
import jax.numpy as jnp
import numpy as np
from jax.experimental import pallas as pl
from jax.experimental.pallas import tpu as pltpu


def _matmul_kernel_single_k(x_ref, w_ref, o_ref):
    # x_ref: [tile_b, k_dim], w_ref: [k_dim, tile_o], o_ref: [tile_b, tile_o]
    o_ref[...] = jnp.dot(
        x_ref[...], w_ref[...], preferred_element_type=jnp.float32
    ).astype(o_ref.dtype)


def _matmul_kernel_split_k(x_ref, w_ref, o_ref, acc_ref):
    # Same as above, but accumulating over the K grid axis (axis 2).
    @pl.when(pl.program_id(2) == 0)
    def _():
        acc_ref[...] = jnp.zeros_like(acc_ref)

    acc_ref[...] += jnp.dot(
        x_ref[...], w_ref[...], preferred_element_type=jnp.float32)

    @pl.when(pl.program_id(2) == pl.num_programs(2) - 1)
    def _():
        o_ref[...] = acc_ref[...].astype(o_ref.dtype)


def _round_up(v, m):
    return (v + m - 1) // m * m


def tied_spline_linear_faster(x, weight, weighted_sum, *, tile_b=512,
                              tile_o=512, tile_k=1024, compute_dtype=None):
    """Forward of tied_SplineLinear_FASTER.

    x:            [..., in_features, degree+1]
    weight:       [out_features, degree+1]
    weighted_sum: [out_features, in_features]
    returns:      [..., out_features]
    """
    *other_dims, in_f, dp1 = x.shape
    out_f = weight.shape[0]
    assert weight.shape == (out_f, dp1)
    assert weighted_sum.shape == (out_f, in_f)

    batch = math.prod(other_dims) if other_dims else 1
    k_dim = in_f * dp1
    out_dtype = x.dtype

    # Fold parameters once (outside the kernel):
    #   W_eff[i*dp1 + k, o] = weighted_sum[o, i] * weight[o, k]
    # matching the PyTorch flattening order of x.view(-1, in*d).
    w_eff = (weighted_sum[:, :, None] * weight[:, None, :]).reshape(out_f, k_dim).T

    # Contiguous reshape of x -> [B, in*(degree+1)] (no transpose, no copy).
    x2d = x.reshape(batch, k_dim)

    if compute_dtype is not None:
        x2d = x2d.astype(compute_dtype)
        w_eff = w_eff.astype(compute_dtype)

    # Batch tile: large (good MXU utilization, ~85%+ of HBM roofline) but
    # sublane-aligned and never larger than needed for small batches.
    tb = _round_up(min(tile_b, _round_up(batch, 8)), 8)

    # Output tile: lane-dense (multiple of 128) when out_f allows; otherwise
    # the full extent (BlockSpec requires mult-of-128 or full dim).  Tiny
    # out_f (<128) means masked stores, acceptable since the output is a small
    # fraction of total HBM traffic here.
    if out_f % 128 == 0:
        to = min(out_f, tile_o)
    else:
        to = out_f

    # K tile: split (and zero-pad, so padded K contributes nothing) only when
    # the contraction dim is large enough that whole-K tiles would bloat VMEM.
    if k_dim > tile_k:
        tk = tile_k  # multiple of 128
        k_total = _round_up(k_dim, tk)
        if k_total != k_dim:
            x2d = jnp.pad(x2d, ((0, 0), (0, k_total - k_dim)))
            w_eff = jnp.pad(w_eff, ((0, k_total - k_dim), (0, 0)))
    else:
        tk = k_dim
        k_total = k_dim

    nb = pl.cdiv(batch, tb)
    no = pl.cdiv(out_f, to)
    nk = k_total // tk
    grid = (nb, no, nk)

    if nk == 1:
        kernel = _matmul_kernel_single_k
        scratch = []
    else:
        kernel = _matmul_kernel_split_k
        scratch = [pltpu.VMEM((tb, to), jnp.float32)]

    out = pl.pallas_call(
        kernel,
        out_shape=jax.ShapeDtypeStruct((batch, out_f), out_dtype),
        grid_spec=pltpu.PrefetchScalarGridSpec(
            num_scalar_prefetch=0,
            grid=grid,
            in_specs=[
                pl.BlockSpec((tb, tk), lambda i, j, k: (i, k)),
                pl.BlockSpec((tk, to), lambda i, j, k: (k, j)),
            ],
            out_specs=pl.BlockSpec((tb, to), lambda i, j, k: (i, j)),
            scratch_shapes=scratch,
        ),
        compiler_params=pltpu.CompilerParams(
            dimension_semantics=("parallel", "parallel", "arbitrary"),
            vmem_limit_bytes=32 * 1024 * 1024,
        ),
    )(x2d, w_eff)

    return out.reshape(tuple(other_dims) + (out_f,))


def _trunc_normal(key, shape, std):
    # Matches nn.init.trunc_normal_(mean=0, std=std, a=-2, b=2) closely enough
    # for deterministic synthetic init.
    return std * jax.random.truncated_normal(key, -2.0, 2.0, shape, jnp.float32)


if __name__ == "__main__":
    in_features = 16
    out_features = 32
    degree = 3
    init_scale = 0.1

    key = jax.random.PRNGKey(0)
    kx, kw, kws = jax.random.split(key, 3)

    # x: [other_dims..., in_features, degree+1]
    x = jax.random.normal(kx, (2, 8, in_features, degree + 1), jnp.float32)
    weight = _trunc_normal(kw, (out_features, degree + 1), init_scale)
    weighted_sum = _trunc_normal(kws, (out_features, in_features), init_scale)

    result = tied_spline_linear_faster(x, weight, weighted_sum)
    result = jax.block_until_ready(result)

    # Reference check (pure JAX).
    ref = jnp.einsum("abik,oi,ok->abo", x, weighted_sum, weight)
    assert result.shape == (2, 8, out_features)
    assert np.allclose(np.asarray(result), np.asarray(ref), atol=1e-4, rtol=1e-4)

    print("KERNEL_OK")
</pallas_src>

<mosaic_0001>
module attributes {stable_mosaic.version = 11 : i64} {
  func.func @_matmul_kernel_single_k(%arg0: i32, %arg1: i32, %arg2: i32, %arg3: memref<16x64xf32, #tpu.memory_space<vmem>>, %arg4: memref<64x32xf32, #tpu.memory_space<vmem>>, %arg5: memref<16x32xf32, #tpu.memory_space<vmem>>) attributes {dimension_semantics = [#tpu.dimension_semantics<parallel>, #tpu.dimension_semantics<parallel>, #tpu.dimension_semantics<arbitrary>], iteration_bounds = array<i64: 1, 1, 1>, scalar_prefetch = 0 : i64, scratch_operands = 0 : i64, tpu.core_type = #tpu.core_type<tc>, window_params = [{transform_indices = @transform_0, window_bounds = array<i64: 16, 64>}, {transform_indices = @transform_1, window_bounds = array<i64: 64, 32>}, {transform_indices = @transform_2, window_bounds = array<i64: 16, 32>}]} {
    %c0 = arith.constant 0 : index
    %c0_0 = arith.constant 0 : index
    %0 = vector.load %arg3[%c0, %c0_0] : memref<16x64xf32, #tpu.memory_space<vmem>>, vector<16x64xf32>
    %c0_1 = arith.constant 0 : index
    %c0_2 = arith.constant 0 : index
    %1 = vector.load %arg4[%c0_1, %c0_2] : memref<64x32xf32, #tpu.memory_space<vmem>>, vector<64x32xf32>
    %cst = arith.constant dense<0.000000e+00> : vector<16x32xf32>
    %2 = tpu.matmul %0, %1, %cst {dimension_numbers = #tpu.dot_dimension_numbers<[1], [0], [0], [1], [0, 0, 1, 1], [], []>} : vector<16x64xf32>, vector<64x32xf32>, vector<16x32xf32> -> vector<16x32xf32>
    %c0_3 = arith.constant 0 : index
    %c0_4 = arith.constant 0 : index
    %3 = vector.load %arg5[%c0_3, %c0_4] : memref<16x32xf32, #tpu.memory_space<vmem>>, vector<16x32xf32>
    tpu.vector_store %arg5[%c0_3, %c0_4], %2 {strides = array<i32>} : memref<16x32xf32, #tpu.memory_space<vmem>>, vector<16x32xf32>,
    return
  }
  func.func @transform_0(%arg0: i32, %arg1: i32, %arg2: i32) -> (i32, i32) {
    %c0_i32 = arith.constant 0 : i32
    return %arg0, %arg2 : i32, i32
  }
  func.func @transform_1(%arg0: i32, %arg1: i32, %arg2: i32) -> (i32, i32) {
    %c0_i32 = arith.constant 0 : i32
    return %arg2, %arg1 : i32, i32
  }
  func.func @transform_2(%arg0: i32, %arg1: i32, %arg2: i32) -> (i32, i32) {
    %c0_i32 = arith.constant 0 : i32
    return %arg0, %arg1 : i32, i32
  }
}

</mosaic_0001>

<llo_original>
// kernel: tpu_custom_call.1
$region0: #{tpu_custom_call.1}
  #allocation0 [shape = 'u32[]', space=smem, size = 0x4, offset = 0x4, fixed_abs, tag = 'smem constant byte address 0x4 - core index']
  #allocation1 [shape = 'u32[72,128]{1,0:T(1,128)}', space=vmem, size = 0x9000, scoped, tag = 'internal scratch']
  %s0 = inlined_call_operand.vmem [shape: f32[16,64], index: 0, kind: input, shape index: {}]
  %s1 = inlined_call_operand.vmem [shape: f32[64,32], index: 1, kind: input, shape index: {}]
  %s2 = inlined_call_operand.hbm [shape: f32[16,32], index: 2, kind: output, shape index: {}]
  %s3 = sld [smem:[#allocation0]]
  $region18: #{tpu_custom_call.1} parent=0
    _
  %s5 = ssub.s32 1, %s3
  %s6 = scalar_select 0, %s5, %s3
  $region1: #{tpu_custom_call.1} parent=0
    #allocation2 [shape = 'u8[8192]{0}', space=vmem, size = 0x2000, scoped, tag = 'output window, operand 0, single buffered']
    #allocation3 [shape = 's32[1]{0}', space=sflag, size = 0x4, scoped, tag = 'scoped memory for tpu_custom_call.1']
    %7 = vsyncpa [#allocation3], 0
    // Predicated region
    $region2: #{tpu_custom_call.1} parent=1 // pred_check
      _
    $region3: #{tpu_custom_call.1} parent=1 // pred_check_branch
      %9 = sbr.rel (0) target = $region5
    $region4: #{tpu_custom_call.1} parent=1 // pred_region
      _
    $region5: #{tpu_custom_call.1} parent=1 // pred_fallthru
      _
    // Predicated region
    $region6: #{tpu_custom_call.1} parent=1 // pred_check
      _
    $region7: #{tpu_custom_call.1} parent=1 // pred_check_branch
      %11 = sbr.rel (0) target = $region9
    $region8: #{tpu_custom_call.1} parent=1 // pred_region
      _
    $region9: #{tpu_custom_call.1} parent=1 // pred_fallthru
      _
    %v12 = vld [vmem:[%s0] sm:$0xff]
    %v13 = vld [vmem:[%s0 + $0x8] sm:$0xff]
    %v14 = vld [vmem:[%s1] sm:$0xff]
    %v15 = vld [vmem:[%s1 + $0x8] sm:$0xff]
    %v16 = vld [vmem:[%s1 + $0x10] sm:$0xff]
    %v17 = vld [vmem:[%s1 + $0x18] sm:$0xff]
    %v18 = vld [vmem:[%s1 + $0x20] sm:$0xff]
    %v19 = vld [vmem:[%s1 + $0x28] sm:$0xff]
    %v20 = vld [vmem:[%s1 + $0x30] sm:$0xff]
    %v21 = vld [vmem:[%s1 + $0x38] sm:$0xff]
    %vm22 = vcmask 523264
    %v24 = vsel %vm22, %v12, 0
    %v27 = vsel %vm22, %v13, 0
    %29 = vmatpush.msra.mxu0 0.0
    %30 = vmatpush.msra.mxu0 0.0
    %31 = vmatpush.msra.mxu0 0.0
    %32 = vmatpush.msra.mxu0 0.0
    %33 = vmatpush.msra.mxu0 0.0
    %34 = vmatpush.msra.mxu0 0.0
    %35 = vmatpush.msra.mxu0 0.0
    %36 = vmatpush.msra.mxu0 0.0
    %37 = vmatpush.msra.mxu0 %v21
    %38 = vmatpush.msra.mxu0 %v20
    %39 = vmatpush.msra.mxu0 %v19
    %40 = vmatpush.msra.mxu0 %v18
    %41 = vmatpush.msra.mxu0 %v17
    %42 = vmatpush.msra.mxu0 %v16
    %43 = vmatpush.msra.mxu0 %v15
    %44 = vmatpush.msra.mxu0 %v14
    %45 = vmatmul.f32.gmra.mxu0 %v24
    %v46 = vpop.f32.mrf.mxu0
    %v47 = vadd.f32 0.0, %v46
    %48 = vmatmul.f32.gmra.mxu0 %v27
    %v49 = vpop.f32.mrf.mxu0
    %v50 = vadd.f32 0.0, %v49
    %51 = vdwg.mxu0
    %vm52 = vcmask 261120
    %53 = vst.msk [vmem:[#allocation2] sm:$0xff] %vm52, %v47
    %54 = vst.msk [vmem:[#allocation2 + $0x8] sm:$0xff] %vm52, %v50
    // Predicated region
    $region10: #{tpu_custom_call.1} parent=1 // pred_check
      _
    $region11: #{tpu_custom_call.1} parent=1 // pred_check_branch
      %56 = sbr.rel (0) target = $region13
    $region12: #{tpu_custom_call.1} parent=1 // pred_region
      %58 = vsyncadd [#allocation3], 0
      %s59 = sshll.u32 [#allocation2], 4
      %s60 = int_to_ptr.vmem [resolvable:$true] %s59
      %s61 = sshll.u32 %s2, 4
      %s62 = int_to_ptr.hbm [resolvable:$true] %s61
      %67 = dma.vmem_to_hbm [thread:$0]  %s60, 256, %s62, [#allocation3], 128, 128, 8
    $region13: #{tpu_custom_call.1} parent=1 // pred_fallthru
      _
    // Predicated region
    $region14: #{tpu_custom_call.1} parent=1 // pred_check
      _
    $region15: #{tpu_custom_call.1} parent=1 // pred_check_branch
      %69 = sbr.rel (0) target = $region17
    $region16: #{tpu_custom_call.1} parent=1 // pred_region
      %71 = dma.done [#allocation3], 256
    $region17: #{tpu_custom_call.1} parent=1 // pred_fallthru
      _
    %72 = vsyncpa [#allocation3], 1

</llo_original>
